<compile_context>
chip_gen: v6e
topology: v6e:2x2x1
jax: 0.10.0
libtpu: 0.0.40
codegen_flags: <defaults>
</compile_context>

<pallas_src>
import jax
import jax.numpy as jnp
from jax.experimental import pallas as pl
from jax.experimental.pallas import tpu as pltpu

_LANE = 128


def _hand_type_loss_kernel(pred_ref, gt_ref, valid_ref, loss_ref):
    # pred_ref, gt_ref : (C, tb)   batch on lanes, classes on sublanes
    # valid_ref        : (1, tb)
    # loss_ref         : (1, tb)
    p = pred_ref[...].astype(jnp.float32)       # upcast in-register (VPU math in f32)
    gt = gt_ref[...].astype(jnp.float32)
    valid = valid_ref[...].astype(jnp.float32)

    # binary_cross_entropy (reduction='none'); PyTorch clamps log terms at -100.
    log_p = jnp.maximum(jnp.log(p), -100.0)
    log_1mp = jnp.maximum(jnp.log(1.0 - p), -100.0)
    bce = -(gt * log_p + (1.0 - gt) * log_1mp)  # (C, tb)

    # Mean over classes == sublane reduction, then the per-sample validity mask.
    loss = jnp.mean(bce, axis=0, keepdims=True)  # (1, tb)
    loss_ref[...] = loss * valid                 # lane-dense, unmasked store


def _hand_type_loss_jnp(hand_type_out, hand_type_gt, hand_type_valid):
    """Plain-JAX path (also the correctness reference). Math in float32."""
    p = hand_type_out.astype(jnp.float32)
    gt = hand_type_gt.astype(jnp.float32)
    valid = hand_type_valid.astype(jnp.float32)
    log_p = jnp.maximum(jnp.log(p), -100.0)
    log_1mp = jnp.maximum(jnp.log(1.0 - p), -100.0)
    bce = -(gt * log_p + (1.0 - gt) * log_1mp)
    return bce.mean(axis=1) * valid


def hand_type_loss(hand_type_out, hand_type_gt, hand_type_valid, *,
                   max_tile=32768, min_pallas_batch=1024):
    """hand_type_out, hand_type_gt: (B, C); hand_type_valid: (B,). Returns (B,) f32."""
    B, C = hand_type_out.shape
    b_pad = max(_LANE, pl.cdiv(B, _LANE) * _LANE)

    # Small-B fast path: the kernel moves <1 KB for the real InterHand shape
    # (B=8, C=2); pallas_call launch + transpose/pad copies would dominate.
    if b_pad < min_pallas_batch:
        return _hand_type_loss_jnp(hand_type_out, hand_type_gt, hand_type_valid)

    # Lane-dense layout: batch -> lanes, classes -> sublanes.  Keep the HBM
    # dtype (bf16 stays bf16) and upcast inside the kernel.
    pred = hand_type_out.T                              # (C, B)
    gt = hand_type_gt.T                                 # (C, B)
    valid = hand_type_valid.reshape(1, B)               # (1, B)

    pad = b_pad - B
    if pad:
        # 0.5 keeps log() finite in padded lanes; valid=0 zeros them out and the
        # wrapper slices them away anyway.
        pred = jnp.pad(pred, ((0, 0), (0, pad)), constant_values=0.5)
        gt = jnp.pad(gt, ((0, 0), (0, pad)))
        valid = jnp.pad(valid, ((0, 0), (0, pad)))

    tile_cap = max(_LANE, (max_tile // _LANE) * _LANE)  # lane-aligned tile cap
    tb = min(b_pad, tile_cap)
    grid = (pl.cdiv(b_pad, tb),)

    bytes_accessed = (
        pred.size * pred.dtype.itemsize
        + gt.size * gt.dtype.itemsize
        + valid.size * valid.dtype.itemsize
        + b_pad * 4  # output
    )
    cost = pl.CostEstimate(
        flops=10 * b_pad * C,
        transcendentals=2 * b_pad * C,
        bytes_accessed=int(bytes_accessed),
    )

    out = pl.pallas_call(
        _hand_type_loss_kernel,
        out_shape=jax.ShapeDtypeStruct((1, b_pad), jnp.float32),
        grid=grid,
        in_specs=[
            pl.BlockSpec((C, tb), lambda i: (0, i)),   # predictions
            pl.BlockSpec((C, tb), lambda i: (0, i)),   # targets
            pl.BlockSpec((1, tb), lambda i: (0, i)),   # validity mask
        ],
        out_specs=pl.BlockSpec((1, tb), lambda i: (0, i)),
        compiler_params=pltpu.CompilerParams(
            dimension_semantics=("parallel",),
        ),
        cost_estimate=cost,
    )(pred, gt, valid)

    return out[0, :B]


if __name__ == "__main__":
    key = jax.random.PRNGKey(0)
    k1, k2, k3 = jax.random.split(key, 3)

    # InterHand: 2-way hand-type prediction (right, left), small batch.
    B, C = 8, 2
    hand_type_out = jax.nn.sigmoid(jax.random.normal(k1, (B, C), dtype=jnp.float32))
    hand_type_gt = jax.random.bernoulli(k2, 0.5, (B, C)).astype(jnp.float32)
    hand_type_valid = jax.random.bernoulli(k3, 0.75, (B,)).astype(jnp.float32)

    ref = _hand_type_loss_jnp(hand_type_out, hand_type_gt, hand_type_valid)

    # 1) Force the Pallas kernel even at B=8 (default routes small B to jnp).
    out = hand_type_loss(hand_type_out, hand_type_gt, hand_type_valid,
                         min_pallas_batch=0)
    out = jax.block_until_ready(out)
    assert out.shape == (B,), out.shape
    assert jnp.allclose(out, ref, atol=1e-5, rtol=1e-5), (out, ref)

    # 2) Default routing for small B takes the jnp fast path; same result.
    out_fast = jax.block_until_ready(
        hand_type_loss(hand_type_out, hand_type_gt, hand_type_valid))
    assert jnp.allclose(out_fast, ref, atol=1e-5, rtol=1e-5), (out_fast, ref)

    # 3) Exercise lane padding and a multi-step grid through the Pallas path.
    B2 = 300
    j1, j2, j3 = jax.random.split(jax.random.PRNGKey(1), 3)
    p2 = jax.nn.sigmoid(jax.random.normal(j1, (B2, C), dtype=jnp.float32))
    g2 = jax.random.bernoulli(j2, 0.5, (B2, C)).astype(jnp.float32)
    v2 = jax.random.bernoulli(j3, 0.75, (B2,)).astype(jnp.float32)
    out2 = jax.block_until_ready(
        hand_type_loss(p2, g2, v2, max_tile=128, min_pallas_batch=0))
    ref2 = _hand_type_loss_jnp(p2, g2, v2)
    assert out2.shape == (B2,), out2.shape
    assert jnp.allclose(out2, ref2, atol=1e-5, rtol=1e-5), (out2, ref2)

    print("KERNEL_OK")
</pallas_src>

<mosaic_0001>
module attributes {stable_mosaic.version = 11 : i64} {
  func.func @_hand_type_loss_kernel(%arg0: i32, %arg1: memref<2x128xf32, #tpu.memory_space<vmem>>, %arg2: memref<2x128xf32, #tpu.memory_space<vmem>>, %arg3: memref<1x128xf32, #tpu.memory_space<vmem>>, %arg4: memref<1x128xf32, #tpu.memory_space<vmem>>) attributes {dimension_semantics = [#tpu.dimension_semantics<parallel>], iteration_bounds = array<i64: 1>, scalar_prefetch = 0 : i64, scratch_operands = 0 : i64, tpu.core_type = #tpu.core_type<tc>, window_params = [{transform_indices = @transform_0, window_bounds = array<i64: 2, 128>}, {transform_indices = @transform_1, window_bounds = array<i64: 2, 128>}, {transform_indices = @transform_2, window_bounds = array<i64: 1, 128>}, {transform_indices = @transform_3, window_bounds = array<i64: 1, 128>}]} {
    %c0 = arith.constant 0 : index
    %c0_0 = arith.constant 0 : index
    %0 = vector.load %arg1[%c0, %c0_0] : memref<2x128xf32, #tpu.memory_space<vmem>>, vector<2x128xf32>
    %c0_1 = arith.constant 0 : index
    %c0_2 = arith.constant 0 : index
    %1 = vector.load %arg2[%c0_1, %c0_2] : memref<2x128xf32, #tpu.memory_space<vmem>>, vector<2x128xf32>
    %c0_3 = arith.constant 0 : index
    %c0_4 = arith.constant 0 : index
    %2 = vector.load %arg3[%c0_3, %c0_4] : memref<1x128xf32, #tpu.memory_space<vmem>>, vector<1x128xf32>
    %3 = math.log %0 : vector<2x128xf32>
    %cst = arith.constant -1.000000e+02 : f32
    %4 = vector.broadcast %cst : f32 to vector<2x128xf32>
    %5 = arith.maximumf %3, %4 : vector<2x128xf32>
    %cst_5 = arith.constant 1.000000e+00 : f32
    %6 = vector.broadcast %cst_5 : f32 to vector<2x128xf32>
    %7 = arith.subf %6, %0 : vector<2x128xf32>
    %8 = math.log %7 : vector<2x128xf32>
    %cst_6 = arith.constant -1.000000e+02 : f32
    %9 = vector.broadcast %cst_6 : f32 to vector<2x128xf32>
    %10 = arith.maximumf %8, %9 : vector<2x128xf32>
    %11 = arith.mulf %1, %5 : vector<2x128xf32>
    %cst_7 = arith.constant 1.000000e+00 : f32
    %12 = vector.broadcast %cst_7 : f32 to vector<2x128xf32>
    %13 = arith.subf %12, %1 : vector<2x128xf32>
    %14 = arith.mulf %13, %10 : vector<2x128xf32>
    %15 = arith.addf %11, %14 : vector<2x128xf32>
    %cst_8 = arith.constant 0.000000e+00 : f32
    %16 = vector.broadcast %cst_8 : f32 to vector<2x128xf32>
    %17 = arith.subf %16, %15 : vector<2x128xf32>
    %cst_9 = arith.constant dense<0.000000e+00> : vector<128xf32>
    %18 = vector.multi_reduction <add>, %17, %cst_9 [0] : vector<2x128xf32> to vector<128xf32>
    %19 = vector.shape_cast %18 : vector<128xf32> to vector<1x128xf32>
    %cst_10 = arith.constant 2.000000e+00 : f32
    %20 = vector.broadcast %cst_10 : f32 to vector<1x128xf32>
    %21 = arith.divf %19, %20 : vector<1x128xf32>
    %22 = arith.mulf %21, %2 : vector<1x128xf32>
    %c0_11 = arith.constant 0 : index
    %c0_12 = arith.constant 0 : index
    %23 = vector.load %arg4[%c0_11, %c0_12] : memref<1x128xf32, #tpu.memory_space<vmem>>, vector<1x128xf32>
    tpu.vector_store %arg4[%c0_11, %c0_12], %22 {strides = array<i32>} : memref<1x128xf32, #tpu.memory_space<vmem>>, vector<1x128xf32>,
    return
  }
  func.func @transform_0(%arg0: i32) -> (i32, i32) {
    %c0_i32 = arith.constant 0 : i32
    %c0_i32_0 = arith.constant 0 : i32
    return %c0_i32, %arg0 : i32, i32
  }
  func.func @transform_1(%arg0: i32) -> (i32, i32) {
    %c0_i32 = arith.constant 0 : i32
    %c0_i32_0 = arith.constant 0 : i32
    return %c0_i32, %arg0 : i32, i32
  }
  func.func @transform_2(%arg0: i32) -> (i32, i32) {
    %c0_i32 = arith.constant 0 : i32
    %c0_i32_0 = arith.constant 0 : i32
    return %c0_i32, %arg0 : i32, i32
  }
  func.func @transform_3(%arg0: i32) -> (i32, i32) {
    %c0_i32 = arith.constant 0 : i32
    %c0_i32_0 = arith.constant 0 : i32
    return %c0_i32, %arg0 : i32, i32
  }
}

</mosaic_0001>

<llo_original>
// kernel: tpu_custom_call.1
$region0: #{tpu_custom_call.1}
  #allocation0 [shape = 'u32[]', space=smem, size = 0x4, offset = 0x4, fixed_abs, tag = 'smem constant byte address 0x4 - core index']
  #allocation1 [shape = 'u32[144,128]{1,0:T(1,128)}', space=vmem, size = 0x12000, scoped, tag = 'internal scratch']
  %s0 = inlined_call_operand.hbm [shape: f32[2,128], index: 0, kind: input, shape index: {}]
  %s1 = inlined_call_operand.hbm [shape: f32[2,128], index: 1, kind: input, shape index: {}]
  %s2 = inlined_call_operand.vmem [shape: f32[1,128], index: 2, kind: input, shape index: {}]
  %s3 = inlined_call_operand.hbm [shape: f32[1,128], index: 3, kind: output, shape index: {}]
  %s4 = sld [smem:[#allocation0]]
  $region30: #{tpu_custom_call.1} parent=0
    _
  %s6 = ssub.s32 1, %s4
  %s7 = scalar_select 0, %s6, %s4
  $region1: #{tpu_custom_call.1} parent=0
    #allocation2 [shape = 'u8[1024]{0}', space=vmem, size = 0x400, scoped, tag = 'input window, operand 0, single buffered']
    #allocation3 [shape = 's32[1]{0}', space=sflag, size = 0x4, scoped, tag = 'scoped memory for tpu_custom_call.1']
    #allocation4 [shape = 's32[1]{0}', space=sflag, size = 0x4, scoped, tag = 'scoped memory for tpu_custom_call.1']
    #allocation5 [shape = 'u8[1024]{0}', space=vmem, size = 0x400, scoped, tag = 'input window, operand 1, single buffered']
    #allocation6 [shape = 's32[1]{0}', space=sflag, size = 0x4, scoped, tag = 'scoped memory for tpu_custom_call.1']
    #allocation7 [shape = 'u8[512]{0}', space=vmem, size = 0x400, scoped, tag = 'output window, operand 0, single buffered']
    %8 = vsyncpa [#allocation3], 0
    %9 = vsyncpa [#allocation6], 0
    %10 = vsyncpa [#allocation4], 0
    // Predicated region
    $region2: #{tpu_custom_call.1} parent=1 // pred_check
      _
    $region3: #{tpu_custom_call.1} parent=1 // pred_check_branch
      %12 = sbr.rel (0) target = $region5
    $region4: #{tpu_custom_call.1} parent=1 // pred_region
      %s14 = ssub.s32 32, 32
      %15 = vsyncadd [#allocation3], %s14
      %s17 = sshll.u32 [#allocation2], 4
      %s18 = int_to_ptr.vmem [resolvable:$true] %s17
      %20 = dma.hbm_to_vmem [thread:$0]  %s0, 32, %s18, [#allocation3]
    $region5: #{tpu_custom_call.1} parent=1 // pred_fallthru
      _
    // Predicated region
    $region6: #{tpu_custom_call.1} parent=1 // pred_check
      _
    $region7: #{tpu_custom_call.1} parent=1 // pred_check_branch
      %22 = sbr.rel (0) target = $region9
    $region8: #{tpu_custom_call.1} parent=1 // pred_region
      %s24 = ssub.s32 32, 32
      %25 = vsyncadd [#allocation6], %s24
      %s27 = sshll.u32 [#allocation5], 4
      %s28 = int_to_ptr.vmem [resolvable:$true] %s27
      %30 = dma.hbm_to_vmem [thread:$0]  %s1, 32, %s28, [#allocation6]
    $region9: #{tpu_custom_call.1} parent=1 // pred_fallthru
      _
    // Predicated region
    $region10: #{tpu_custom_call.1} parent=1 // pred_check
      _
    $region11: #{tpu_custom_call.1} parent=1 // pred_check_branch
      %32 = sbr.rel (0) target = $region13
    $region12: #{tpu_custom_call.1} parent=1 // pred_region
      _
    $region13: #{tpu_custom_call.1} parent=1 // pred_fallthru
      _
    // Predicated region
    $region14: #{tpu_custom_call.1} parent=1 // pred_check
      _
    $region15: #{tpu_custom_call.1} parent=1 // pred_check_branch
      %34 = sbr.rel (0) target = $region17
    $region16: #{tpu_custom_call.1} parent=1 // pred_region
      %35 = dma.done [#allocation3], 32
    $region17: #{tpu_custom_call.1} parent=1 // pred_fallthru
      _
    // Predicated region
    $region18: #{tpu_custom_call.1} parent=1 // pred_check
      _
    $region19: #{tpu_custom_call.1} parent=1 // pred_check_branch
      %37 = sbr.rel (0) target = $region21
    $region20: #{tpu_custom_call.1} parent=1 // pred_region
      %38 = dma.done [#allocation6], 32
    $region21: #{tpu_custom_call.1} parent=1 // pred_fallthru
      _
    %v39 = vld [vmem:[#allocation2] sm:$0x3]
    %v40 = vld [vmem:[#allocation5] sm:$0x3]
    %v41 = vld [vmem:[%s2] sm:$0x1]
    %v42 = vlog2.pop %v39
    %v43 = vmul.f32 %v42, 0.6931472
    %v44 = vmax.f32 %v43, -100.0
    %v45 = vsub.f32 1.0, %v39
    %v46 = vlog2.pop %v45
    %v47 = vmul.f32 %v46, 0.6931472
    %v48 = vmax.f32 %v47, -100.0
    %v49 = vmul.f32 %v40, %v44
    %v50 = vsub.f32 1.0, %v40
    %v51 = vmul.f32 %v50, %v48
    %v52 = vadd.f32 %v49, %v51
    %v53 = vsub.f32 0.0, %v52
    %vm54 = vcmask 1041408
    %v55 = vsel %vm54, %v53, 0.0
    %v56 = vrot.slane %v55, 4
    %v57 = vadd.f32 %v55, %v56
    %v58 = vrot.slane %v57, 2
    %v59 = vadd.f32 %v57, %v58
    %v60 = vrot.slane %v59, 1
    %v61 = vadd.f32 %v59, %v60
    %v62 = vrcp.pop 2.0
    %v63 = vmul.f32 %v61, %v62
    %v64 = vmul.f32 %v63, %v41
    %65 = vst [vmem:[#allocation7] sm:$0x1] %v64
    // Predicated region
    $region22: #{tpu_custom_call.1} parent=1 // pred_check
      _
    $region23: #{tpu_custom_call.1} parent=1 // pred_check_branch
      %67 = sbr.rel (0) target = $region25
    $region24: #{tpu_custom_call.1} parent=1 // pred_region
      %s69 = ssub.s32 16, 16
      %70 = vsyncadd [#allocation4], %s69
      %s72 = sshll.u32 [#allocation7], 4
      %s73 = int_to_ptr.vmem [resolvable:$true] %s72
      %75 = dma.vmem_to_hbm [thread:$0]  %s73, 16, %s3, [#allocation4]
    $region25: #{tpu_custom_call.1} parent=1 // pred_fallthru
      _
    // Predicated region
    $region26: #{tpu_custom_call.1} parent=1 // pred_check
      _
    $region27: #{tpu_custom_call.1} parent=1 // pred_check_branch
      %77 = sbr.rel (0) target = $region29
    $region28: #{tpu_custom_call.1} parent=1 // pred_region
      %78 = dma.done [#allocation4], 16
    $region29: #{tpu_custom_call.1} parent=1 // pred_fallthru
      _
    %79 = vsyncpa [#allocation3], 1
    %80 = vsyncpa [#allocation6], 1
    %81 = vsyncpa [#allocation4], 1

</llo_original>
